<compile_context>
chip_gen: v7x
topology: tpu7x:2x2x1
jax: 0.10.0
libtpu: 0.0.40
codegen_flags: <defaults>
</compile_context>

<pallas_src>
import jax
import jax.numpy as jnp
from jax.experimental import pallas as pl
from jax.experimental.pallas import tpu as pltpu

GAMMA = 1.5
ALPHA = 0.25
LANE = 128            # lane dim
MAX_TILE_ROWS = 1024  # max sublane rows per grid step (512 KiB f32 per buffer)
CHUNK_ROWS = 128      # rows per in-kernel chunk (keeps intermediates small)
NUM_CORES = 2         # leading "parallel" axis (megacore on v7x; serial elsewhere)


def _round_up(x, m):
    return ((x + m - 1) // m) * m


def _cdiv(a, b):
    return -(-a // b)


def _make_focal_kernel(tile_rows, chunk_rows, rows_bulk, blocks_per_core,
                       needs_mask):
    """Build the kernel body (all sizes are static Python ints)."""
    n_chunks = tile_rows // chunk_rows

    def kernel(pred_ref, true_ref, out_ref):
        c = pl.program_id(0)
        j = pl.program_id(1)

        # Output block index is constant along j -> VMEM-resident accumulator.
        @pl.when(j == 0)
        def _():
            out_ref[...] = jnp.zeros_like(out_ref)

        # Unclamped global row offset of this block (used only for masking).
        base_row = (c * blocks_per_core + j) * tile_rows

        def accumulate(row_off):
            x = pred_ref[pl.ds(row_off, chunk_rows), :].astype(jnp.float32)
            y = true_ref[pl.ds(row_off, chunk_rows), :].astype(jnp.float32)

            # One exp per element, shared by stable BCE and sigmoid.
            e = jnp.exp(-jnp.abs(x))
            one_plus_e = 1.0 + e
            # BCEWithLogits(reduction='none'): max(x,0) - x*y + log(1+exp(-|x|))
            bce = jnp.maximum(x, 0.0) - x * y + jnp.log(one_plus_e)
            # sigmoid(x) = 1/(1+e) if x>=0 else e/(1+e)   (exact reciprocal)
            inv = 1.0 / one_plus_e
            p = jnp.where(x >= 0.0, inv, e * inv)

            # t = 1 - p_t, folded:  t = y + p*(1 - 2y)
            t = y + p * (1.0 - 2.0 * y)
            # alpha_factor = y*a + (1-y)*(1-a) = (1-a) + y*(2a-1)
            alpha_factor = (1.0 - ALPHA) + y * (2.0 * ALPHA - 1.0)
            if GAMMA == 1.5:
                modulating_factor = t * jnp.sqrt(t)      # t ** 1.5
            else:
                modulating_factor = t ** GAMMA
            loss = bce * alpha_factor * modulating_factor

            if needs_mask:
                # Mask rows past the end of the (rows_bulk, 128) bulk slab.
                rid = base_row + row_off + jax.lax.broadcasted_iota(
                    jnp.int32, (chunk_rows, LANE), 0)
                loss = jnp.where(rid < rows_bulk, loss, 0.0)

            # Partial sum into the (8,128) vreg-shaped resident output block.
            out_ref[0] += jnp.sum(loss.reshape(-1, 8, LANE), axis=0)

        if n_chunks == 1:
            accumulate(0)
        else:
            @pl.loop(0, n_chunks)
            def _(i):
                accumulate(pl.multiple_of(i * chunk_rows, chunk_rows))

    return kernel


def _focal_sum_jax(pred, true):
    """Plain-JAX focal-loss *sum* (used only for the <128-element tail)."""
    x = pred.astype(jnp.float32)
    y = true.astype(jnp.float32)
    bce = jnp.maximum(x, 0.0) - x * y + jnp.log1p(jnp.exp(-jnp.abs(x)))
    p = jax.nn.sigmoid(x)
    p_t = y * p + (1 - y) * (1 - p)
    alpha_factor = y * ALPHA + (1 - y) * (1 - ALPHA)
    mod = (1.0 - p_t) ** GAMMA
    return jnp.sum(bce * alpha_factor * mod)


def focal_loss(pred, true):
    """Focal loss (gamma=1.5, alpha=0.25) over BCE-with-logits, mean-reduced."""
    assert pred.shape == true.shape
    n_valid = pred.size
    if n_valid == 0:
        return jnp.float32(0.0)

    p_flat = pred.reshape(-1)
    t_flat = true.reshape(-1)

    rows_bulk = n_valid // LANE          # full 128-lane rows
    n_bulk = rows_bulk * LANE

    # Sub-128-element tail handled in plain JAX (tiny, no padding copies).
    tail_sum = jnp.float32(0.0)
    if n_bulk < n_valid:
        tail_sum = _focal_sum_jax(p_flat[n_bulk:], t_flat[n_bulk:])

    if rows_bulk == 0:
        return tail_sum / jnp.float32(n_valid)

    # Zero-copy (rows, 128) view of the 128-aligned bulk in native dtype.
    p2 = (p_flat if n_bulk == n_valid else p_flat[:n_bulk]).reshape(rows_bulk, LANE)
    t2 = (t_flat if n_bulk == n_valid else t_flat[:n_bulk]).reshape(rows_bulk, LANE)

    def sub_align(dt):
        # f32 -> 8, bf16 -> 16, int8/fp8 -> 32 sublane alignment
        return max(8, 32 // jnp.dtype(dt).itemsize)

    align = max(sub_align(pred.dtype), sub_align(true.dtype))

    # Choose block count first, then derive tile_rows from it (minimizes waste).
    blocks_needed = _cdiv(rows_bulk, MAX_TILE_ROWS)
    blocks_total = _round_up(blocks_needed, NUM_CORES)
    blocks_per_core = blocks_total // NUM_CORES
    tile_rows = _round_up(_cdiv(rows_bulk, blocks_total), align)
    if tile_rows > CHUNK_ROWS:
        tile_rows = _round_up(tile_rows, CHUNK_ROWS)
        chunk_rows = CHUNK_ROWS
    else:
        chunk_rows = tile_rows

    # Blocks may overshoot the bulk; mask only when they actually do.
    needs_mask = blocks_total * tile_rows != rows_bulk
    last_block = _cdiv(rows_bulk, tile_rows) - 1   # last block touching real data

    if blocks_total > last_block + 1:
        # Some trailing grid steps would index past the array: clamp the DMA to
        # the last valid block; the in-kernel row mask zeroes their contribution.
        def idx_map(c, j):
            return (jnp.minimum(c * blocks_per_core + j, last_block), 0)
    else:
        def idx_map(c, j):
            return (c * blocks_per_core + j, 0)

    kernel = _make_focal_kernel(tile_rows, chunk_rows, rows_bulk,
                                blocks_per_core, needs_mask)

    partials = pl.pallas_call(
        kernel,
        out_shape=jax.ShapeDtypeStruct((NUM_CORES, 8, LANE), jnp.float32),
        grid_spec=pltpu.PrefetchScalarGridSpec(
            num_scalar_prefetch=0,
            grid=(NUM_CORES, blocks_per_core),
            in_specs=[
                pl.BlockSpec((tile_rows, LANE), idx_map),
                pl.BlockSpec((tile_rows, LANE), idx_map),
            ],
            out_specs=pl.BlockSpec((1, 8, LANE), lambda c, j: (c, 0, 0)),
        ),
        compiler_params=pltpu.CompilerParams(
            dimension_semantics=("parallel", "arbitrary"),
        ),
    )(p2, t2)

    # reduction == 'mean' (divide by the true element count).
    return (jnp.sum(partials) + tail_sum) / jnp.float32(n_valid)


def focal_loss_ref(pred, true):
    """Pure-JAX reference mirroring the PyTorch module."""
    x = pred.astype(jnp.float32)
    y = true.astype(jnp.float32)
    bce = jnp.maximum(x, 0.0) - x * y + jnp.log1p(jnp.exp(-jnp.abs(x)))
    p = jax.nn.sigmoid(x)
    p_t = y * p + (1 - y) * (1 - p)
    alpha_factor = y * ALPHA + (1 - y) * (1 - ALPHA)
    mod = (1.0 - p_t) ** GAMMA
    return jnp.mean(bce * alpha_factor * mod)


if __name__ == "__main__":
    key = jax.random.PRNGKey(0)
    k1, k2 = jax.random.split(key)
    # NCHW logits and binary targets (detection-style: batch=2, ch=4, 16x16 grid)
    pred = jax.random.normal(k1, (2, 4, 16, 16), dtype=jnp.float32)
    true = (jax.random.uniform(k2, (2, 4, 16, 16)) > 0.7).astype(jnp.float32)

    out = jax.block_until_ready(focal_loss(pred, true))
    ref = jax.block_until_ready(focal_loss_ref(pred, true))

    assert jnp.allclose(out, ref, atol=1e-5, rtol=1e-5), (out, ref)
    print("KERNEL_OK")
</pallas_src>

<mosaic_0001>
module attributes {stable_mosaic.version = 11 : i64} {
  func.func @kernel(%arg0: i32, %arg1: i32, %arg2: memref<8x128xf32, #tpu.memory_space<vmem>>, %arg3: memref<8x128xf32, #tpu.memory_space<vmem>>, %arg4: memref<1x8x128xf32, #tpu.memory_space<vmem>>) attributes {dimension_semantics = [#tpu.dimension_semantics<parallel>, #tpu.dimension_semantics<arbitrary>], iteration_bounds = array<i64: 2, 1>, scalar_prefetch = 0 : i64, scratch_operands = 0 : i64, tpu.core_type = #tpu.core_type<tc>, window_params = [{transform_indices = @transform_0, window_bounds = array<i64: 8, 128>}, {transform_indices = @transform_1, window_bounds = array<i64: 8, 128>}, {transform_indices = @transform_2, window_bounds = array<i64: 1, 8, 128>}]} {
    %c0_i32 = arith.constant 0 : i32
    %0 = arith.cmpi eq, %arg1, %c0_i32 : i32
    %1 = arith.extui %0 : i1 to i32
    %c0_i32_0 = arith.constant 0 : i32
    %2 = arith.cmpi ne, %1, %c0_i32_0 : i32
    scf.if %2 {
      %cst_19 = arith.constant 0.000000e+00 : f32
      %45 = vector.broadcast %cst_19 : f32 to vector<1x8x128xf32>
      %c0_20 = arith.constant 0 : index
      %c0_21 = arith.constant 0 : index
      %c0_22 = arith.constant 0 : index
      %46 = vector.load %arg4[%c0_20, %c0_21, %c0_22] : memref<1x8x128xf32, #tpu.memory_space<vmem>>, vector<1x8x128xf32>
      tpu.vector_store %arg4[%c0_20, %c0_21, %c0_22], %45 {strides = array<i32>} : memref<1x8x128xf32, #tpu.memory_space<vmem>>, vector<1x8x128xf32>,
    } else {
    }
    %c0 = arith.constant 0 : index
    %c0_1 = arith.constant 0 : index
    %3 = vector.load %arg2[%c0, %c0_1] : memref<8x128xf32, #tpu.memory_space<vmem>>, vector<8x128xf32>
    %c0_2 = arith.constant 0 : index
    %c0_3 = arith.constant 0 : index
    %4 = vector.load %arg3[%c0_2, %c0_3] : memref<8x128xf32, #tpu.memory_space<vmem>>, vector<8x128xf32>
    %5 = math.absf %3 : vector<8x128xf32>
    %cst = arith.constant 0.000000e+00 : f32
    %6 = vector.broadcast %cst : f32 to vector<8x128xf32>
    %7 = arith.subf %6, %5 : vector<8x128xf32>
    %8 = math.exp %7 : vector<8x128xf32>
    %cst_4 = arith.constant 1.000000e+00 : f32
    %9 = vector.broadcast %cst_4 : f32 to vector<8x128xf32>
    %10 = arith.addf %9, %8 : vector<8x128xf32>
    %cst_5 = arith.constant 0.000000e+00 : f32
    %11 = vector.broadcast %cst_5 : f32 to vector<8x128xf32>
    %12 = arith.maximumf %3, %11 : vector<8x128xf32>
    %13 = arith.mulf %3, %4 : vector<8x128xf32>
    %14 = arith.subf %12, %13 : vector<8x128xf32>
    %15 = math.log %10 : vector<8x128xf32>
    %16 = arith.addf %14, %15 : vector<8x128xf32>
    %cst_6 = arith.constant 1.000000e+00 : f32
    %17 = vector.broadcast %cst_6 : f32 to vector<8x128xf32>
    %18 = arith.divf %17, %10 : vector<8x128xf32>
    %cst_7 = arith.constant 0.000000e+00 : f32
    %19 = vector.broadcast %cst_7 : f32 to vector<8x128xf32>
    %20 = arith.cmpf oge, %3, %19 : vector<8x128xf32>
    %21 = arith.mulf %8, %18 : vector<8x128xf32>
    %22 = arith.select %20, %18, %21 : vector<8x128xi1>, vector<8x128xf32>
    %cst_8 = arith.constant 2.000000e+00 : f32
    %23 = vector.broadcast %cst_8 : f32 to vector<8x128xf32>
    %24 = arith.mulf %23, %4 : vector<8x128xf32>
    %cst_9 = arith.constant 1.000000e+00 : f32
    %25 = vector.broadcast %cst_9 : f32 to vector<8x128xf32>
    %26 = arith.subf %25, %24 : vector<8x128xf32>
    %27 = arith.mulf %22, %26 : vector<8x128xf32>
    %28 = arith.addf %4, %27 : vector<8x128xf32>
    %cst_10 = arith.constant -5.000000e-01 : f32
    %29 = vector.broadcast %cst_10 : f32 to vector<8x128xf32>
    %30 = arith.mulf %4, %29 : vector<8x128xf32>
    %cst_11 = arith.constant 7.500000e-01 : f32
    %31 = vector.broadcast %cst_11 : f32 to vector<8x128xf32>
    %32 = arith.addf %31, %30 : vector<8x128xf32>
    %33 = math.sqrt %28 : vector<8x128xf32>
    %34 = arith.mulf %28, %33 : vector<8x128xf32>
    %35 = arith.mulf %16, %32 : vector<8x128xf32>
    %36 = arith.mulf %35, %34 : vector<8x128xf32>
    %c0_12 = arith.constant 0 : index
    %c0_13 = arith.constant 0 : index
    %c0_14 = arith.constant 0 : index
    %37 = vector.load %arg4[%c0_12, %c0_13, %c0_14] : memref<1x8x128xf32, #tpu.memory_space<vmem>>, vector<1x8x128xf32>
    %38 = vector.shape_cast %37 : vector<1x8x128xf32> to vector<8x128xf32>
    %39 = vector.shape_cast %36 : vector<8x128xf32> to vector<1x8x128xf32>
    %cst_15 = arith.constant dense<0.000000e+00> : vector<8x128xf32>
    %40 = vector.multi_reduction <add>, %39, %cst_15 [0] : vector<1x8x128xf32> to vector<8x128xf32>
    %41 = arith.addf %38, %40 : vector<8x128xf32>
    %c0_16 = arith.constant 0 : index
    %c0_17 = arith.constant 0 : index
    %c0_18 = arith.constant 0 : index
    %42 = vector.load %arg4[%c0_16, %c0_17, %c0_18] : memref<1x8x128xf32, #tpu.memory_space<vmem>>, vector<1x8x128xf32>
    %43 = vector.shape_cast %42 : vector<1x8x128xf32> to vector<8x128xf32>
    %44 = vector.shape_cast %41 : vector<8x128xf32> to vector<1x8x128xf32>
    tpu.vector_store %arg4[%c0_16, %c0_17, %c0_18], %44 {strides = array<i32>} : memref<1x8x128xf32, #tpu.memory_space<vmem>>, vector<1x8x128xf32>,
    return
  }
  func.func @transform_0(%arg0: i32, %arg1: i32) -> (i32, i32) {
    %c1_i32 = arith.constant 1 : i32
    %0 = arith.muli %arg0, %c1_i32 : i32
    %1 = arith.addi %0, %arg1 : i32
    %c0_i32 = arith.constant 0 : i32
    %c0_i32_0 = arith.constant 0 : i32
    return %1, %c0_i32 : i32, i32
  }
  func.func @transform_1(%arg0: i32, %arg1: i32) -> (i32, i32) {
    %c1_i32 = arith.constant 1 : i32
    %0 = arith.muli %arg0, %c1_i32 : i32
    %1 = arith.addi %0, %arg1 : i32
    %c0_i32 = arith.constant 0 : i32
    %c0_i32_0 = arith.constant 0 : i32
    return %1, %c0_i32 : i32, i32
  }
  func.func @transform_2(%arg0: i32, %arg1: i32) -> (i32, i32, i32) {
    %c0_i32 = arith.constant 0 : i32
    %c0_i32_0 = arith.constant 0 : i32
    %c0_i32_1 = arith.constant 0 : i32
    return %arg0, %c0_i32, %c0_i32_0 : i32, i32, i32
  }
}

</mosaic_0001>

<llo_original>
// kernel: tpu_custom_call.1
$region0: #{tpu_custom_call.1}
  #allocation0 [shape = 'u32[]', space=smem, size = 0x4, offset = 0x4, fixed_abs, tag = 'smem constant byte address 0x4 - core index']
  #allocation1 [shape = 'u32[144,128]{1,0:T(1,128)}', space=vmem, size = 0x12000, scoped, tag = 'internal scratch']
  %s0 = inlined_call_operand.hbm [shape: f32[16,128], index: 0, kind: input, shape index: {}]
  %s1 = inlined_call_operand.hbm [shape: f32[16,128], index: 1, kind: input, shape index: {}]
  %s2 = inlined_call_operand.hbm [shape: f32[2,8,128], index: 2, kind: output, shape index: {}]
  %s3 = sld [smem:[#allocation0]]
  $region53: #{tpu_custom_call.1} parent=0
    _
  %s5 = ssub.s32 1, %s3
  %s6 = scalar_select 0, %s5, %s3
  $region1: #{tpu_custom_call.1} parent=0
    #allocation2 [shape = 'u8[8192]{0}', space=vmem, size = 0x2000, scoped, tag = 'input window, operand 0']
    #allocation3 [shape = 's32[2]{0}', space=sflag, size = 0x8, scoped, tag = 'scoped memory for tpu_custom_call.1']
    #allocation4 [shape = 's32[2]{0}', space=sflag, size = 0x8, scoped, tag = 'scoped memory for tpu_custom_call.1']
    #allocation5 [shape = 'u8[8192]{0}', space=vmem, size = 0x2000, scoped, tag = 'input window, operand 1']
    #allocation6 [shape = 's32[2]{0}', space=sflag, size = 0x8, scoped, tag = 'scoped memory for tpu_custom_call.1']
    #allocation7 [shape = 'u8[8192]{0}', space=vmem, size = 0x2000, scoped, tag = 'output window, operand 0']
    %7 = vsyncpa [#allocation3], 0
    %s8 = scalar_lea.sflag [#allocation3], 1
    %9 = vsyncpa %s8, 0
    %10 = vsyncpa [#allocation6], 0
    %s11 = scalar_lea.sflag [#allocation6], 1
    %12 = vsyncpa %s11, 0
    %13 = vsyncpa [#allocation4], 0
    %s14 = scalar_lea.sflag [#allocation4], 1
    %15 = vsyncpa %s14, 0
    loop: start=0, step=1, limit=4
    $region2: #{tpu_custom_call.1} parent=1 // loop_pre_header
      _
    $region3: #{tpu_custom_call.1} parent=1 // loop_header
      %s17 = sphi 0, %s21
      %p18 = scmp.ge.s32.totalorder %s17, 4
      %s24 = sphi 0, %s36
      %s25 = sphi 0, %s32
      %s26 = sphi 0, %s24
      %s27 = sphi 0, %s25
      %s28 = sphi 0, %s26
      %s29 = sphi 0, %s27
      %s41 = sphi 0, %s43
      %s44 = sphi 0, %s41
      %s45 = sphi 0, %s44
      %s61 = sphi 0, %s45
      %s69 = sphi 0, %s71
      %s72 = sphi 0, %s69
      %s73 = sphi 0, %s72
      %s89 = sphi 0, %s73
      %s95 = sphi 0, %s97
      %s98 = sphi 0, %s95
      %s99 = sphi 0, %s98
      %s115 = sphi 0, %s99
    $region4: #{tpu_custom_call.1} parent=1 // loop_header_branch
      %20 = sbr.rel (%p18) target = $region8
    $region5: #{tpu_custom_call.1} parent=1 // loop_body
      %s22 = ssub.s32 %s17, 1
      %s23 = ssub.s32 %s17, 2
      %s30 = sadd.s32 1, %s25
      %p31 = scmp.ge.s32.totalorder %s30, 1
      %s32 = scalar_select %p31, 0, %s30
      %s33 = sadd.s32 1, %s24
      %s34 = scalar_select %p31, %s33, %s24
      %p35 = scmp.ge.s32.totalorder %s34, 2
      %s36 = scalar_select %p35, 0, %s34
      %s37 = sadd.s32 %s24, %s25
      %s38 = sadd.s32 %s36, %s32
      %s39 = ssub.s32 %s37, %s38
      %p40 = scmp.eq.s32.totalorder %s39, 0
      %s42 = sadd.s32 %s41, 1
      %s43 = scalar_select %p40, %s41, %s42
      %p46 = pneg %p40
      %p47 = scmp.eq.s32.totalorder %s17, 1
      %p48 = por %p46, %p47
      %p49 = scmp.ne.s32.totalorder %s41, %s44
      %p50 = scmp.eq.s32.totalorder %s17, 0
      %p51 = por %p49, %p50
      %p52 = scmp.ne.s32.totalorder %s41, %s44
      %p53 = scmp.eq.s32.totalorder %s22, 1
      %p54 = por %p52, %p53
      %p55 = scmp.ne.s32.totalorder %s44, %s45
      %p56 = scmp.eq.s32.totalorder %s22, 0
      %p57 = por %p55, %p56
      %p58 = scmp.ne.s32.totalorder %s44, %s45
      %p59 = scmp.eq.s32.totalorder %s23, 1
      %p60 = por %p58, %p59
      %p62 = scmp.ne.s32.totalorder %s45, %s61
      %p63 = scmp.eq.s32.totalorder %s23, 0
      %p64 = por %p62, %p63
      %s65 = sadd.s32 %s24, %s25
      %s66 = sadd.s32 %s36, %s32
      %s67 = ssub.s32 %s65, %s66
      %p68 = scmp.eq.s32.totalorder %s67, 0
      %s70 = sadd.s32 %s69, 1
      %s71 = scalar_select %p68, %s69, %s70
      %p74 = pneg %p68
      %p75 = scmp.eq.s32.totalorder %s17, 1
      %p76 = por %p74, %p75
      %p77 = scmp.ne.s32.totalorder %s69, %s72
      %p78 = scmp.eq.s32.totalorder %s17, 0
      %p79 = por %p77, %p78
      %p80 = scmp.ne.s32.totalorder %s69, %s72
      %p81 = scmp.eq.s32.totalorder %s22, 1
      %p82 = por %p80, %p81
      %p83 = scmp.ne.s32.totalorder %s72, %s73
      %p84 = scmp.eq.s32.totalorder %s22, 0
      %p85 = por %p83, %p84
      %p86 = scmp.ne.s32.totalorder %s72, %s73
      %p87 = scmp.eq.s32.totalorder %s23, 1
      %p88 = por %p86, %p87
      %p90 = scmp.ne.s32.totalorder %s73, %s89
      %p91 = scmp.eq.s32.totalorder %s23, 0
      %p92 = por %p90, %p91
      %s93 = ssub.s32 %s24, %s36
      %p94 = scmp.eq.s32.totalorder %s93, 0
      %s96 = sadd.s32 %s95, 1
      %s97 = scalar_select %p94, %s95, %s96
      %p100 = pneg %p94
      %p101 = scmp.eq.s32.totalorder %s17, 1
      %p102 = por %p100, %p101
      %p103 = scmp.ne.s32.totalorder %s95, %s98
      %p104 = scmp.eq.s32.totalorder %s17, 0
      %p105 = por %p103, %p104
      %p106 = scmp.ne.s32.totalorder %s95, %s98
      %p107 = scmp.eq.s32.totalorder %s22, 1
      %p108 = por %p106, %p107
      %p109 = scmp.ne.s32.totalorder %s98, %s99
      %p110 = scmp.eq.s32.totalorder %s22, 0
      %p111 = por %p109, %p110
      %p112 = scmp.ne.s32.totalorder %s98, %s99
      %p113 = scmp.eq.s32.totalorder %s23, 1
      %p114 = por %p112, %p113
      %p116 = scmp.ne.s32.totalorder %s99, %s115
      %p117 = scmp.eq.s32.totalorder %s23, 0
      %p118 = por %p116, %p117
      %p119 = scmp.le.s32.totalorder 1, %s17
      %p120 = scmp.lt.s32.totalorder %s17, 3
      %p121 = pnand %p119, %p120
      %p122 = pneg %p121
      // Predicated region
      $region9: #{tpu_custom_call.1} parent=5 // pred_check
        _
      $region10: #{tpu_custom_call.1} parent=5 // pred_check_branch
        %124 = sbr.rel (%p121) target = $region12
      $region11: #{tpu_custom_call.1} parent=5 // pred_region
        %s125 = ssub.s32 %s17, 1
      $region12: #{tpu_custom_call.1} parent=5 // pred_fallthru
        _
      %p126 = scmp.lt.s32.totalorder %s17, 2
      // Predicated region
      $region13: #{tpu_custom_call.1} parent=5 // pred_check
        %p127 = pneg %p126
      $region14: #{tpu_custom_call.1} parent=5 // pred_check_branch
        %129 = sbr.rel (%p127) target = $region16
      $region15: #{tpu_custom_call.1} parent=5 // pred_region
        // Predicated region
        $region17: #{tpu_custom_call.1} parent=15 // pred_check
          %p130 = pneg %p51
        $region18: #{tpu_custom_call.1} parent=15 // pred_check_branch
          %132 = sbr.rel (%p130) target = $region20
        $region19: #{tpu_custom_call.1} parent=15 // pred_region
          %s133 = sand.u32 %s41, 1
          %s134 = scalar_lea.sflag [#allocation3], %s133
          %s135 = sand.u32 %s41, 1
          %s136 = smul.addr %s135, 8
          %s137 = scalar_lea.vmem [#allocation2], %s136
          %s138 = sadd.s32 %s24, %s25
          %s140 = ssub.s32 128, 128
          %141 = vsyncadd %s134, %s140
          %s142 = smul.addr %s138, 128
          %s143 = scalar_lea.hbm %s0, %s142
          %s145 = sshll.u32 %s137, 4
          %s146 = int_to_ptr.vmem [resolvable:$true] %s145
          %148 = dma.hbm_to_vmem [thread:$0]  %s143, 128, %s146, %s134
        $region20: #{tpu_custom_call.1} parent=15 // pred_fallthru
          _
        // Predicated region
        $region21: #{tpu_custom_call.1} parent=15 // pred_check
          %p149 = pneg %p79
        $region22: #{tpu_custom_call.1} parent=15 // pred_check_branch
          %151 = sbr.rel (%p149) target = $region24
        $region23: #{tpu_custom_call.1} parent=15 // pred_region
          %s152 = sand.u32 %s69, 1
          %s153 = scalar_lea.sflag [#allocation6], %s152
          %s154 = sand.u32 %s69, 1
          %s155 = smul.addr %s154, 8
          %s156 = scalar_lea.vmem [#allocation5], %s155
          %s157 = sadd.s32 %s24, %s25
          %s159 = ssub.s32 128, 128
          %160 = vsyncadd %s153, %s159
          %s161 = smul.addr %s157, 128
          %s162 = scalar_lea.hbm %s1, %s161
          %s164 = sshll.u32 %s156, 4
          %s165 = int_to_ptr.vmem [resolvable:$true] %s164
          %167 = dma.hbm_to_vmem [thread:$0]  %s162, 128, %s165, %s153
        $region24: #{tpu_custom_call.1} parent=15 // pred_fallthru
          _
      $region16: #{tpu_custom_call.1} parent=5 // pred_fallthru
        _
      %p168 = scmp.le.s32.totalorder 1, %s17
      %p169 = scmp.lt.s32.totalorder %s17, 3
      %p170 = pnand %p168, %p169
      %p171 = pneg %p170
      // Predicated region
      $region25: #{tpu_custom_call.1} parent=5 // pred_check
        _
      $region26: #{tpu_custom_call.1} parent=5 // pred_check_branch
        %173 = sbr.rel (%p170) target = $region28
      $region27: #{tpu_custom_call.1} parent=5 // pred_region
        %s174 = ssub.s32 %s17, 1
        %s175 = sand.u32 %s44, 1
        %s176 = scalar_lea.sflag [#allocation3], %s175
        %s177 = sand.u32 %s44, 1
        %s178 = smul.addr %s177, 8
        %s179 = scalar_lea.vmem [#allocation2], %s178
        // Predicated region
        $region29: #{tpu_custom_call.1} parent=27 // pred_check
          %p180 = pneg %p57
        $region30: #{tpu_custom_call.1} parent=27 // pred_check_branch
          %182 = sbr.rel (%p180) target = $region32
        $region31: #{tpu_custom_call.1} parent=27 // pred_region
          %183 = dma.done %s176, 128
        $region32: #{tpu_custom_call.1} parent=27 // pred_fallthru
          _
        %s184 = sand.u32 %s72, 1
        %s185 = scalar_lea.sflag [#allocation6], %s184
        %s186 = sand.u32 %s72, 1
        %s187 = smul.addr %s186, 8
        %s188 = scalar_lea.vmem [#allocation5], %s187
        // Predicated region
        $region33: #{tpu_custom_call.1} parent=27 // pred_check
          %p189 = pneg %p85
        $region34: #{tpu_custom_call.1} parent=27 // pred_check_branch
          %191 = sbr.rel (%p189) target = $region36
        $region35: #{tpu_custom_call.1} parent=27 // pred_region
          %192 = dma.done %s185, 128
        $region36: #{tpu_custom_call.1} parent=27 // pred_fallthru
          _
        %s193 = sand.u32 %s44, 1
        %s194 = scalar_lea.sflag [#allocation3], %s193
        %s195 = sand.u32 %s44, 1
        %s196 = smul.addr %s195, 8
        %s197 = scalar_lea.vmem [#allocation2], %s196
        %p198 = pneg %p57
        %p199 = pneg %p54
        %s200 = sand.u32 %s72, 1
        %s201 = scalar_lea.sflag [#allocation6], %s200
        %s202 = sand.u32 %s72, 1
        %s203 = smul.addr %s202, 8
        %s204 = scalar_lea.vmem [#allocation5], %s203
        %p205 = pneg %p85
        %p206 = pneg %p82
        %p207 = pneg %p111
        %p208 = pneg %p108
        %s209 = sand.u32 %s98, 1
        %s210 = scalar_lea.sflag [#allocation4], %s209
        %s211 = sand.u32 %s98, 1
        %s212 = smul.addr %s211, 8
        %s213 = scalar_lea.vmem [#allocation7], %s212
        %s214 = sadd.s32 %s26, %s27
        %s215 = sadd.s32 %s26, %s27
        %p216 = scmp.eq.s32.totalorder %s27, 0
        // Predicated region
        $region37: #{tpu_custom_call.1} parent=27 // pred_check
          %p217 = pneg %p216
        $region38: #{tpu_custom_call.1} parent=27 // pred_check_branch
          %219 = sbr.rel (%p217) target = $region40
        $region39: #{tpu_custom_call.1} parent=27 // pred_region
          %220 = vst [vmem:[%s213] sm:$0xff] 0.0
        $region40: #{tpu_custom_call.1} parent=27 // pred_fallthru
          _
        %v221 = vld [vmem:[%s179] sm:$0xff]
        %v222 = vld [vmem:[%s188] sm:$0xff]
        %v223 = vand.u32 2147483647, %v221
        %v224 = vsub.f32 0.0, %v223
        %v225 = vmul.f32 %v224, 1.442695
        %v226 = vpow.pop %v225
        %v227 = vadd.f32 %v226, 1.0
        %v228 = vmax.f32 %v221, 0.0
        %v229 = vmul.f32 %v221, %v222
        %v230 = vsub.f32 %v228, %v229
        %v231 = vlog2.pop %v227
        %v232 = vmul.f32 %v231, 0.6931472
        %v233 = vadd.f32 %v230, %v232
        %v234 = vrcp.pop %v227
        %v235 = vmul.f32 1.0, %v234
        %vm236 = vcmp.ge.f32.partialorder %v221, 0.0
        %v237 = vmul.f32 %v226, %v235
        %v238 = vsel %vm236, %v235, %v237
        %v239 = vmul.f32 %v222, 2.0
        %v240 = vsub.f32 1.0, %v239
        %v241 = vmul.f32 %v238, %v240
        %v242 = vadd.f32 %v222, %v241
        %v243 = vmul.f32 %v222, -0.5
        %v244 = vadd.f32 %v243, 0.75
        %v245 = vrsqrt.pop %v242
        %v246 = vmul.f32 %v242, %v245
        %vm247 = vcmp.eq.f32.partialorder %v242, inf
        %v248 = vsel %vm247, %v242, %v246
        %vm249 = vcmp.eq.f32.partialorder %v242, 0.0
        %v250 = vand.u32 %v242, 2147483648
        %v251 = vsel %vm249, %v250, %v248
        %v252 = vmul.f32 %v242, %v251
        %v253 = vmul.f32 %v233, %v244
        %v254 = vmul.f32 %v253, %v252
        %v255 = vld [vmem:[%s213] sm:$0xff]
        %v256 = vadd.f32 %v254, 0.0
        %v257 = vadd.f32 %v255, %v256
        %258 = vst [vmem:[%s213] sm:$0xff] %v257
        %s259 = sand.u32 %s98, 1
        %s260 = scalar_lea.sflag [#allocation4], %s259
        %s261 = sand.u32 %s98, 1
        %s262 = smul.addr %s261, 8
        %s263 = scalar_lea.vmem [#allocation7], %s262
        // Predicated region
        $region41: #{tpu_custom_call.1} parent=27 // pred_check
          %p264 = pneg %p108
        $region42: #{tpu_custom_call.1} parent=27 // pred_check_branch
          %266 = sbr.rel (%p264) target = $region44
        $region43: #{tpu_custom_call.1} parent=27 // pred_region
          %s268 = ssub.s32 128, 128
          %269 = vsyncadd %s260, %s268
          %s270 = smul.addr %s26, 128
          %s271 = scalar_lea.hbm %s2, %s270
          %s273 = sshll.u32 %s263, 4
          %s274 = int_to_ptr.vmem [resolvable:$true] %s273
          %276 = dma.vmem_to_hbm [thread:$0]  %s274, 128, %s271, %s260
        $region44: #{tpu_custom_call.1} parent=27 // pred_fallthru
          _
      $region28: #{tpu_custom_call.1} parent=5 // pred_fallthru
        _
      %p277 = scmp.le.s32.totalorder 2, %s17
      // Predicated region
      $region45: #{tpu_custom_call.1} parent=5 // pred_check
        %p278 = pneg %p277
      $region46: #{tpu_custom_call.1} parent=5 // pred_check_branch
        %280 = sbr.rel (%p278) target = $region48
      $region47: #{tpu_custom_call.1} parent=5 // pred_region
        %s281 = ssub.s32 %s17, 2
        // Predicated region
        $region49: #{tpu_custom_call.1} parent=47 // pred_check
          %p282 = pneg %p114
        $region50: #{tpu_custom_call.1} parent=47 // pred_check_branch
          %284 = sbr.rel (%p282) target = $region52
        $region51: #{tpu_custom_call.1} parent=47 // pred_region
          %s285 = sand.u32 %s99, 1
          %s286 = scalar_lea.sflag [#allocation4], %s285
          %s287 = sand.u32 %s99, 1
          %s288 = smul.addr %s287, 8
          %s289 = scalar_lea.vmem [#allocation7], %s288
          %290 = dma.done %s286, 128
        $region52: #{tpu_custom_call.1} parent=47 // pred_fallthru
          _
      $region48: #{tpu_custom_call.1} parent=5 // pred_fallthru
        _
    $region6: #{tpu_custom_call.1} parent=1 // loop_footer
      %s21 = sadd.s32 1, %s17
    $region7: #{tpu_custom_call.1} parent=1 // loop_footer_branch
      %16 = sbr.rel target = $region3
    $region8: #{tpu_custom_call.1} parent=1 // loop_exit
      _
    %291 = vsyncpa [#allocation3], 1
    %s292 = scalar_lea.sflag [#allocation3], 1
    %293 = vsyncpa %s292, 1
    %294 = vsyncpa [#allocation6], 1
    %s295 = scalar_lea.sflag [#allocation6], 1
    %296 = vsyncpa %s295, 1
    %297 = vsyncpa [#allocation4], 1
    %s298 = scalar_lea.sflag [#allocation4], 1
    %299 = vsyncpa %s298, 1

</llo_original>
